<compile_context>
chip_gen: v5e
topology: v5e:2x2
jax: 0.10.0
libtpu: 0.0.40
codegen_flags: <defaults>
</compile_context>

<pallas_src>
import functools

import jax
import jax.numpy as jnp
from jax.experimental import pallas as pl
from jax.experimental.pallas import tpu as pltpu


def _ensemble_kernel(x_ref, w_ref, b_ref, o_ref, acc_ref, *, inv_hw, inv_m):
    # x_ref:  (tile_B, C, hw_tile)  one spatial tile of the input
    # w_ref:  (C, Kp)               pre-summed head weights (sum over models)
    # b_ref:  (1, Kp)               pre-summed biases
    # o_ref:  (tile_B, Kp)          ensemble-averaged logits (lane-dense)
    # acc_ref:(tile_B, C)           running spatial sum for the global pool
    hw = pl.program_id(1)
    n_hw = pl.num_programs(1)

    @pl.when(hw == 0)
    def _():
        acc_ref[...] = jnp.zeros_like(acc_ref)

    # Partial spatial sum over this HW tile (lane-major reduction on the VPU/XLU).
    acc_ref[...] += jnp.sum(x_ref[...], axis=-1)

    @pl.when(hw == n_hw - 1)
    def _():
        pooled = acc_ref[...] * inv_hw                          # (tile_B, C)
        logits = jnp.dot(pooled, w_ref[...],
                         preferred_element_type=jnp.float32)    # (tile_B, Kp)
        o_ref[...] = (logits + b_ref[...]) * inv_m


def _pick_batch_tile(B, max_tile=128):
    """Largest multiple-of-8 divisor of B (<= max_tile), else full B."""
    if B % 8 != 0:
        return B  # full-extent output block is always legal
    best = 8
    t = 8
    while t <= min(B, max_tile):
        if B % t == 0:
            best = t
        t += 8
    return best


def _pick_hw_tile(HW, tile_b, C, target_bytes=4 << 20):
    """Largest multiple-of-128 divisor of HW keeping the x tile near target_bytes."""
    if HW % 128 != 0:
        return HW  # full-extent block is always legal
    max_lanes = max(128, (target_bytes // max(tile_b * C * 4, 1)) // 128 * 128)
    best = 128
    t = 128
    while t <= min(HW, max_lanes):
        if HW % t == 0:
            best = t
        t += 128
    return best


def ensembler_forward(x, w_stack, b_stack):
    """x: (B, C, H, W) f32, w_stack: (M, C, K), b_stack: (M, K).

    Returns (all_out, all_out) with all_out: (B, K), matching the PyTorch
    EnsembelerModel.forward contract.
    """
    B, C, H, W = x.shape
    M, _, K = w_stack.shape
    HW = H * W

    Kp = ((K + 127) // 128) * 128           # lane-dense matmul N / output dim
    tile_b = _pick_batch_tile(B)
    hw_tile = _pick_hw_tile(HW, tile_b, C)

    # Metadata-only reshape of contiguous NCHW -> (B, C, HW); no HBM copy,
    # and no batch padding (B is a leading block dim).
    x_flat = x.reshape(B, C, HW)

    # Linearity: sum the heads once in the wrapper; the kernel applies 1/M.
    w_sum = jnp.pad(jnp.sum(w_stack, axis=0), ((0, 0), (0, Kp - K)))       # (C, Kp)
    b_sum = jnp.pad(jnp.sum(b_stack, axis=0), (0, Kp - K)).reshape(1, Kp)  # (1, Kp)

    # VMEM budget (double-buffered x / w / b / out + pool scratch) with headroom;
    # sized to fit v7x's 64 MiB physical VMEM comfortably.
    x_tile_bytes = tile_b * C * hw_tile * 4
    resident = (2 * x_tile_bytes
                + 2 * C * Kp * 4
                + 2 * Kp * 4
                + 2 * tile_b * Kp * 4
                + tile_b * C * 4)
    vmem_limit = int(min(max(2 * resident, 8 << 20), 48 << 20))

    kernel = functools.partial(_ensemble_kernel,
                               inv_hw=float(1.0 / HW),
                               inv_m=float(1.0 / M))

    out_padded = pl.pallas_call(
        kernel,
        out_shape=jax.ShapeDtypeStruct((B, Kp), jnp.float32),
        grid_spec=pltpu.PrefetchScalarGridSpec(
            num_scalar_prefetch=0,
            grid=(B // tile_b, HW // hw_tile),
            in_specs=[
                pl.BlockSpec((tile_b, C, hw_tile), lambda b, h: (b, 0, h)),
                pl.BlockSpec((C, Kp), lambda b, h: (0, 0)),
                pl.BlockSpec((1, Kp), lambda b, h: (0, 0)),
            ],
            out_specs=pl.BlockSpec((tile_b, Kp), lambda b, h: (b, 0)),
            scratch_shapes=[pltpu.VMEM((tile_b, C), jnp.float32)],
        ),
        compiler_params=pltpu.CompilerParams(
            # Batch axis shards across v7x's 2 TensorCores; HW axis is the
            # pooling reduction (kept last by convention).
            dimension_semantics=("parallel", "arbitrary"),
            vmem_limit_bytes=vmem_limit,
        ),
    )(x_flat, w_sum, b_sum)

    all_out = out_padded[:, :K]
    return all_out, all_out


def _reference_forward(x, w_stack, b_stack):
    """Pure-JAX reference mirroring the PyTorch ensemble semantics."""
    M = w_stack.shape[0]
    pooled = jnp.mean(x, axis=(2, 3))                      # (B, C)
    all_out = None
    for i in range(M):
        out = pooled @ w_stack[i] + b_stack[i]             # (B, K)
        all_out = out if all_out is None else out + all_out
    all_out = all_out / M
    return all_out, all_out


if __name__ == "__main__":
    # Small shapes consistent with an NCHW classifier ensemble.
    B, C, H, W = 2, 4, 16, 16     # batch, channels, spatial
    K = 32                        # num classes
    M = 3                         # number of ensemble members

    key = jax.random.PRNGKey(0)
    kx, kw, kb = jax.random.split(key, 3)

    x = jax.random.normal(kx, (B, C, H, W), dtype=jnp.float32)
    # Deterministic synthetic parameters for the M sub-models.
    w_stack = jax.random.normal(kw, (M, C, K), dtype=jnp.float32) * 0.1
    b_stack = jax.random.normal(kb, (M, K), dtype=jnp.float32) * 0.01

    out, out2 = ensembler_forward(x, w_stack, b_stack)
    out = jax.block_until_ready(out)

    ref, _ = _reference_forward(x, w_stack, b_stack)
    assert out.shape == (B, K)
    assert out2.shape == (B, K)
    assert jnp.allclose(out, ref, atol=1e-5, rtol=1e-5), "mismatch vs reference"

    print("KERNEL_OK")
</pallas_src>

<mosaic_0001>
module attributes {stable_mosaic.version = 11 : i64} {
  func.func @_ensemble_kernel(%arg0: i32, %arg1: i32, %arg2: memref<2x4x256xf32, #tpu.memory_space<vmem>>, %arg3: memref<4x128xf32, #tpu.memory_space<vmem>>, %arg4: memref<1x128xf32, #tpu.memory_space<vmem>>, %arg5: memref<2x128xf32, #tpu.memory_space<vmem>>, %arg6: memref<2x4xf32, #tpu.memory_space<vmem>>) attributes {dimension_semantics = [#tpu.dimension_semantics<parallel>, #tpu.dimension_semantics<arbitrary>], iteration_bounds = array<i64: 1, 1>, scalar_prefetch = 0 : i64, scratch_operands = 1 : i64, tpu.core_type = #tpu.core_type<tc>, window_params = [{transform_indices = @transform_0, window_bounds = array<i64: 2, 4, 256>}, {pipeline_mode = #tpu.pipeline_mode<synchronous>, transform_indices = @transform_1, window_bounds = array<i64: 4, 128>}, {pipeline_mode = #tpu.pipeline_mode<synchronous>, transform_indices = @transform_2, window_bounds = array<i64: 1, 128>}, {transform_indices = @transform_3, window_bounds = array<i64: 2, 128>}]} {
    %c0_i32 = arith.constant 0 : i32
    %0 = arith.cmpi eq, %arg1, %c0_i32 : i32
    %1 = arith.extui %0 : i1 to i32
    %c0_i32_0 = arith.constant 0 : i32
    %2 = arith.cmpi ne, %1, %c0_i32_0 : i32
    scf.if %2 {
      %cst_9 = arith.constant 0.000000e+00 : f32
      %11 = vector.broadcast %cst_9 : f32 to vector<2x4xf32>
      %c0_10 = arith.constant 0 : index
      %c0_11 = arith.constant 0 : index
      %12 = vector.load %arg6[%c0_10, %c0_11] : memref<2x4xf32, #tpu.memory_space<vmem>>, vector<2x4xf32>
      tpu.vector_store %arg6[%c0_10, %c0_11], %11 {strides = array<i32>} : memref<2x4xf32, #tpu.memory_space<vmem>>, vector<2x4xf32>,
    } else {
    }
    %c0 = arith.constant 0 : index
    %c0_1 = arith.constant 0 : index
    %3 = vector.load %arg6[%c0, %c0_1] : memref<2x4xf32, #tpu.memory_space<vmem>>, vector<2x4xf32>
    %c0_2 = arith.constant 0 : index
    %c0_3 = arith.constant 0 : index
    %c0_4 = arith.constant 0 : index
    %4 = vector.load %arg2[%c0_2, %c0_3, %c0_4] : memref<2x4x256xf32, #tpu.memory_space<vmem>>, vector<2x4x256xf32>
    %cst = arith.constant dense<0.000000e+00> : vector<2x4xf32>
    %5 = vector.multi_reduction <add>, %4, %cst [2] : vector<2x4x256xf32> to vector<2x4xf32>
    %6 = arith.addf %3, %5 : vector<2x4xf32>
    %c0_5 = arith.constant 0 : index
    %c0_6 = arith.constant 0 : index
    %7 = vector.load %arg6[%c0_5, %c0_6] : memref<2x4xf32, #tpu.memory_space<vmem>>, vector<2x4xf32>
    tpu.vector_store %arg6[%c0_5, %c0_6], %6 {strides = array<i32>} : memref<2x4xf32, #tpu.memory_space<vmem>>, vector<2x4xf32>,
    %c0_i32_7 = arith.constant 0 : i32
    %8 = arith.cmpi eq, %arg1, %c0_i32_7 : i32
    %9 = arith.extui %8 : i1 to i32
    %c0_i32_8 = arith.constant 0 : i32
    %10 = arith.cmpi ne, %9, %c0_i32_8 : i32
    scf.if %10 {
      %c0_9 = arith.constant 0 : index
      %c0_10 = arith.constant 0 : index
      %11 = vector.load %arg6[%c0_9, %c0_10] : memref<2x4xf32, #tpu.memory_space<vmem>>, vector<2x4xf32>
      %cst_11 = arith.constant 3.906250e-03 : f32
      %12 = vector.broadcast %cst_11 : f32 to vector<2x4xf32>
      %13 = arith.mulf %11, %12 : vector<2x4xf32>
      %c0_12 = arith.constant 0 : index
      %c0_13 = arith.constant 0 : index
      %14 = vector.load %arg3[%c0_12, %c0_13] : memref<4x128xf32, #tpu.memory_space<vmem>>, vector<4x128xf32>
      %cst_14 = arith.constant dense<0.000000e+00> : vector<2x128xf32>
      %15 = tpu.matmul %13, %14, %cst_14 {dimension_numbers = #tpu.dot_dimension_numbers<[1], [0], [0], [1], [0, 0, 1, 1], [], []>} : vector<2x4xf32>, vector<4x128xf32>, vector<2x128xf32> -> vector<2x128xf32>
      %c0_15 = arith.constant 0 : index
      %c0_16 = arith.constant 0 : index
      %16 = vector.load %arg4[%c0_15, %c0_16] : memref<1x128xf32, #tpu.memory_space<vmem>>, vector<1x128xf32>
      %17 = vector.broadcast %16 : vector<1x128xf32> to vector<2x128xf32>
      %18 = arith.addf %15, %17 : vector<2x128xf32>
      %cst_17 = arith.constant 0.333333343 : f32
      %19 = vector.broadcast %cst_17 : f32 to vector<2x128xf32>
      %20 = arith.mulf %18, %19 : vector<2x128xf32>
      %c0_18 = arith.constant 0 : index
      %c0_19 = arith.constant 0 : index
      %21 = vector.load %arg5[%c0_18, %c0_19] : memref<2x128xf32, #tpu.memory_space<vmem>>, vector<2x128xf32>
      tpu.vector_store %arg5[%c0_18, %c0_19], %20 {strides = array<i32>} : memref<2x128xf32, #tpu.memory_space<vmem>>, vector<2x128xf32>,
    } else {
    }
    return
  }
  func.func @transform_0(%arg0: i32, %arg1: i32) -> (i32, i32, i32) {
    %c0_i32 = arith.constant 0 : i32
    %c0_i32_0 = arith.constant 0 : i32
    return %arg0, %c0_i32, %arg1 : i32, i32, i32
  }
  func.func @transform_1(%arg0: i32, %arg1: i32) -> (i32, i32) {
    %c0_i32 = arith.constant 0 : i32
    %c0_i32_0 = arith.constant 0 : i32
    %c0_i32_1 = arith.constant 0 : i32
    return %c0_i32, %c0_i32_0 : i32, i32
  }
  func.func @transform_2(%arg0: i32, %arg1: i32) -> (i32, i32) {
    %c0_i32 = arith.constant 0 : i32
    %c0_i32_0 = arith.constant 0 : i32
    %c0_i32_1 = arith.constant 0 : i32
    return %c0_i32, %c0_i32_0 : i32, i32
  }
  func.func @transform_3(%arg0: i32, %arg1: i32) -> (i32, i32) {
    %c0_i32 = arith.constant 0 : i32
    %c0_i32_0 = arith.constant 0 : i32
    return %arg0, %c0_i32 : i32, i32
  }
}

</mosaic_0001>

<llo_original>
// kernel: tpu_custom_call.1
$region0: #{tpu_custom_call.1}
  #allocation0 [shape = 'u32[]', space=smem, size = 0x4, offset = 0x4, fixed_abs, tag = 'smem constant byte address 0x4 - core index']
  #allocation1 [shape = 'u32[72,128]{1,0:T(1,128)}', space=vmem, size = 0x9000, scoped, tag = 'internal scratch']
  #allocation2 [shape = 'f32[2,4]{1,0:T(2,128)}', space=vmem, size = 0x400, scoped, tag = 'scratch operand']
  %s0 = inlined_call_operand.hbm [shape: f32[2,4,256], index: 0, kind: input, shape index: {}]
  %s1 = inlined_call_operand.hbm [shape: f32[4,128], index: 1, kind: input, shape index: {}]
  %s2 = inlined_call_operand.vmem [shape: f32[1,128], index: 2, kind: input, shape index: {}]
  %s3 = inlined_call_operand.hbm [shape: f32[2,128], index: 3, kind: output, shape index: {}]
  %s4 = sld [smem:[#allocation0]]
  $region38: #{tpu_custom_call.1} parent=0
    _
  %s6 = ssub.s32 1, %s4
  %s7 = scalar_select 0, %s6, %s4
  $region1: #{tpu_custom_call.1} parent=0
    #allocation3 [shape = 'u8[8192]{0}', space=vmem, size = 0x2000, scoped, tag = 'input window, operand 0, single buffered']
    #allocation4 [shape = 's32[1]{0}', space=sflag, size = 0x4, scoped, tag = 'scoped memory for tpu_custom_call.1']
    #allocation5 [shape = 's32[1]{0}', space=sflag, size = 0x4, scoped, tag = 'scoped memory for tpu_custom_call.1']
    #allocation6 [shape = 'u8[2048]{0}', space=vmem, size = 0x800, scoped, tag = 'input window, operand 1, single buffered']
    #allocation7 [shape = 's32[1]{0}', space=sflag, size = 0x4, scoped, tag = 'scoped memory for tpu_custom_call.1']
    #allocation8 [shape = 'u8[1024]{0}', space=vmem, size = 0x400, scoped, tag = 'output window, operand 0, single buffered']
    %8 = vsyncpa [#allocation4], 0
    %9 = vsyncpa [#allocation7], 0
    %10 = vsyncpa [#allocation5], 0
    // Predicated region
    $region2: #{tpu_custom_call.1} parent=1 // pred_check
      _
    $region3: #{tpu_custom_call.1} parent=1 // pred_check_branch
      %12 = sbr.rel (0) target = $region5
    $region4: #{tpu_custom_call.1} parent=1 // pred_region
      %14 = vsyncadd [#allocation4], 0
      %s15 = sshll.u32 %s0, 4
      %s16 = int_to_ptr.hbm [resolvable:$true] %s15
      %s17 = sshll.u32 [#allocation3], 4
      %s18 = int_to_ptr.vmem [resolvable:$true] %s17
      %23 = dma.hbm_to_vmem [thread:$0]  %s16, 256, %s18, [#allocation4], 128, 128, 8
    $region5: #{tpu_custom_call.1} parent=1 // pred_fallthru
      _
    // Predicated region
    $region6: #{tpu_custom_call.1} parent=1 // pred_check
      _
    $region7: #{tpu_custom_call.1} parent=1 // pred_check_branch
      %25 = sbr.rel (0) target = $region9
    $region8: #{tpu_custom_call.1} parent=1 // pred_region
      %27 = vsyncadd [#allocation7], 0
      %s29 = sshll.u32 %s1, 4
      %s30 = int_to_ptr.hbm [resolvable:$true] %s29
      %s31 = sshll.u32 [#allocation6], 4
      %s32 = int_to_ptr.vmem [resolvable:$true] %s31
      %34 = dma.hbm_to_vmem [thread:$0]  %s30, 64, %s32, [#allocation7]
    $region9: #{tpu_custom_call.1} parent=1 // pred_fallthru
      _
    // Predicated region
    $region10: #{tpu_custom_call.1} parent=1 // pred_check
      _
    $region11: #{tpu_custom_call.1} parent=1 // pred_check_branch
      %36 = sbr.rel (0) target = $region13
    $region12: #{tpu_custom_call.1} parent=1 // pred_region
      _
    $region13: #{tpu_custom_call.1} parent=1 // pred_fallthru
      _
    // Predicated region
    $region14: #{tpu_custom_call.1} parent=1 // pred_check
      _
    $region15: #{tpu_custom_call.1} parent=1 // pred_check_branch
      %38 = sbr.rel (0) target = $region17
    $region16: #{tpu_custom_call.1} parent=1 // pred_region
      %40 = dma.done [#allocation4], 256
    $region17: #{tpu_custom_call.1} parent=1 // pred_fallthru
      _
    // Predicated region
    $region18: #{tpu_custom_call.1} parent=1 // pred_check
      _
    $region19: #{tpu_custom_call.1} parent=1 // pred_check_branch
      %42 = sbr.rel (0) target = $region21
    $region20: #{tpu_custom_call.1} parent=1 // pred_region
      %44 = dma.done [#allocation7], 64
    $region21: #{tpu_custom_call.1} parent=1 // pred_fallthru
      _
    %p45 = scmp.eq.s32.totalorder 0, 0
    // Predicated region
    $region22: #{tpu_custom_call.1} parent=1 // pred_check
      %p46 = pneg %p45
    $region23: #{tpu_custom_call.1} parent=1 // pred_check_branch
      %48 = sbr.rel (%p46) target = $region25
    $region24: #{tpu_custom_call.1} parent=1 // pred_region
      %vm49 = vcmask 25600
      %50 = vst.msk [vmem:[#allocation2] sm:$0x3] %vm49, 0.0
    $region25: #{tpu_custom_call.1} parent=1 // pred_fallthru
      _
    %v51 = vld [vmem:[#allocation2] sm:$0x3]
    %v52 = vld [vmem:[#allocation3] sm:$0xff]
    %v53 = vld [vmem:[#allocation3 + $0x8] sm:$0xff]
    %56 = vst [vmem:[#allocation1] ss:$2 sm:$0xff] %v52
    %v57 = vld.sshfl [vmem:[#allocation1] sm:$0xff pattern:$0x75316420]
    %v58 = vld.sshfl [vmem:[#allocation1 + $0x8] sm:$0xff pattern:$0x75316420]
    %s59 = scalar_lea.vmem [#allocation1], 16
    %60 = vst [vmem:[%s59] ss:$2 sm:$0xff] %v53
    %v61 = vld.sshfl [vmem:[#allocation1 + $0x10] sm:$0xff pattern:$0x75316420]
    %v62 = vld.sshfl [vmem:[#allocation1 + $0x18] sm:$0xff pattern:$0x75316420]
    %vm67 = vcmask 1043456
    %v68 = vsel %vm67, %v57, 0.0
    %v69 = vsel %vm67, %v58, 0.0
    %v70 = vadd.f32 %v68, %v69
    %71 = vadd.xlane.f32.xlu0 %v70
    %v72 = vpop.xlane.xlu0 %71
    %v73 = vsel %vm67, %v61, 0.0
    %v74 = vsel %vm67, %v62, 0.0
    %v75 = vadd.f32 %v73, %v74
    %76 = vadd.xlane.f32.xlu0 %v75
    %v77 = vpop.xlane.xlu0 %76
    %v80 = vlaneseq
    %v81 = vand.u32 %v80, 127
    %v82 = vperm.slane %v72, %v81
    %v83 = vperm.slane %v77, %v81
    %vm84 = vcmask 1041409
    %v85 = vsel %vm84, %v83, %v82
    %v87 = vadd.f32 %v51, %v85
    %vm88 = vcmask 25600
    %89 = vst.msk [vmem:[#allocation2] sm:$0x3] %vm88, %v87
    // Predicated region
    $region26: #{tpu_custom_call.1} parent=1 // pred_check
      %p90 = pneg %p45
    $region27: #{tpu_custom_call.1} parent=1 // pred_check_branch
      %92 = sbr.rel (%p90) target = $region29
    $region28: #{tpu_custom_call.1} parent=1 // pred_region
      %v93 = vld [vmem:[#allocation2] sm:$0x3]
      %v94 = vmul.f32 %v93, 0.00390625
      %v95 = vld [vmem:[#allocation6] sm:$0xf]
      %v96 = vld [vmem:[%s2] sm:$0x1]
      %v98 = vperm.slane %v96, 0
      %vm100 = vcmask 31744
      %v102 = vsel %vm100, %v94, 0
      %v105 = vsel %vm67, %v95, 0
      %107 = vmatpush.msra.mxu0 0.0
      %108 = vmatpush.msra.mxu0 0.0
      %109 = vmatpush.msra.mxu0 0.0
      %110 = vmatpush.msra.mxu0 0.0
      %111 = vmatpush.msra.mxu0 0.0
      %112 = vmatpush.msra.mxu0 0.0
      %113 = vmatpush.msra.mxu0 0.0
      %114 = vmatpush.msra.mxu0 0.0
      %115 = vmatpush.msra.mxu0 0.0
      %116 = vmatpush.msra.mxu0 0.0
      %117 = vmatpush.msra.mxu0 0.0
      %118 = vmatpush.msra.mxu0 0.0
      %119 = vmatpush.msra.mxu0 0.0
      %120 = vmatpush.msra.mxu0 0.0
      %121 = vmatpush.msra.mxu0 0.0
      %122 = vmatpush.msra.mxu0 %v105
      %123 = vmatmul.f32.gmra.mxu0 %v102
      %v124 = vpop.f32.mrf.mxu0
      %v125 = vadd.f32 %v98, %v124
      %126 = vdwg.mxu0
      %v127 = vmul.f32 %v125, 0.33333334
      %128 = vst [vmem:[#allocation8] sm:$0x3] %v127
    $region29: #{tpu_custom_call.1} parent=1 // pred_fallthru
      _
    // Predicated region
    $region30: #{tpu_custom_call.1} parent=1 // pred_check
      _
    $region31: #{tpu_custom_call.1} parent=1 // pred_check_branch
      %130 = sbr.rel (0) target = $region33
    $region32: #{tpu_custom_call.1} parent=1 // pred_region
      %132 = vsyncadd [#allocation5], 0
      %s134 = sshll.u32 [#allocation8], 4
      %s135 = int_to_ptr.vmem [resolvable:$true] %s134
      %s136 = sshll.u32 %s3, 4
      %s137 = int_to_ptr.hbm [resolvable:$true] %s136
      %139 = dma.vmem_to_hbm [thread:$0]  %s135, 32, %s137, [#allocation5]
    $region33: #{tpu_custom_call.1} parent=1 // pred_fallthru
      _
    // Predicated region
    $region34: #{tpu_custom_call.1} parent=1 // pred_check
      _
    $region35: #{tpu_custom_call.1} parent=1 // pred_check_branch
      %141 = sbr.rel (0) target = $region37
    $region36: #{tpu_custom_call.1} parent=1 // pred_region
      %143 = dma.done [#allocation5], 32
    $region37: #{tpu_custom_call.1} parent=1 // pred_fallthru
      _
    %144 = vsyncpa [#allocation4], 1
    %145 = vsyncpa [#allocation7], 1
    %146 = vsyncpa [#allocation5], 1

</llo_original>
